<compile_context>
chip_gen: v7x
topology: tpu7x:2x2x1
jax: 0.10.0
libtpu: 0.0.40
codegen_flags: <defaults>
</compile_context>

<pallas_src>
import functools

import jax
import jax.numpy as jnp
from jax.experimental import pallas as pl
from jax.experimental.pallas import tpu as pltpu


def _shortcut_kernel(x_ref, o_ref, *, w, w_out, h_out, pad, c, compaction):
    # x_ref: (bt, C*h_out, 2W)  packed row r = [x[c, 2h, :], x[c, 2h+1, :]]
    # o_ref: (bt, (C + 2*pad)*h_out, w_out)
    bt = o_ref.shape[0]

    if compaction == "strided":
        # One strided lane load does both selections: even-H rows live in the
        # first W lanes, even-W is the stride-2 sub-pattern.  Exact copy.
        down = x_ref[:, :, pl.ds(0, w_out, stride=2)]        # (bt, C*h_out, w_out)
    else:
        # Fallback: static single-lane slices + one concat, vectorized over
        # the whole block (issued once per grid step, not once per image).
        xe = x_ref[:, :, :w]                                  # even-H rows
        down = jnp.concatenate(
            [xe[:, :, 2 * v:2 * v + 1] for v in range(w_out)], axis=2
        )                                                     # (bt, C*h_out, w_out)

    # Channel zero-padding: write the two pad bands and the data band directly
    # into the output ref (every output element stored exactly once, nothing
    # materialized as a full padded image in registers).
    if pad > 0:
        zband = jnp.zeros((bt, pad * h_out, w_out), dtype=o_ref.dtype)
        o_ref[:, :pad * h_out, :] = zband
        o_ref[:, (pad + c) * h_out:(c + 2 * pad) * h_out, :] = zband
    o_ref[:, pad * h_out:(pad + c) * h_out, :] = down.astype(o_ref.dtype)


def _round_up(n, m):
    return ((n + m - 1) // m) * m


def lambda_shortcut(x_nchw, planes):
    """Pallas version of the LambdaLayer option-A shortcut:
       lambda x: F.pad(x[:, :, ::2, ::2], (0,0,0,0,planes//4,planes//4), 'constant', 0)
    Input/output follow PyTorch NCHW semantics (no layout transposes)."""
    B, C, H, W = x_nchw.shape
    pad = planes // 4
    c_out = C + 2 * pad
    h_out = (H + 1) // 2
    w_out = (W + 1) // 2

    # Odd H (never happens in CIFAR ResNet): append one zero row so the
    # row-pair packing below is well defined; the extra (odd-index) row is
    # never selected.
    if H % 2 != 0:
        x_nchw = jnp.pad(x_nchw, ((0, 0), (0, 0), (0, 1), (0, 0)))
        H = H + 1

    # FREE contiguous reshape: packs each pair of H rows onto one lane row so
    # the H-::2 selection becomes a static lane range inside the kernel.
    x_packed = x_nchw.reshape(B, C * h_out, 2 * W)

    # ---- batch-tile sizing (per-image VMEM with (8,128) tile padding) ------
    itemsize = jnp.dtype(x_nchw.dtype).itemsize
    in_img = _round_up(C * h_out, 8) * _round_up(2 * W, 128) * itemsize
    out_img = _round_up(c_out * h_out, 8) * _round_up(w_out, 128) * itemsize
    tmp_img = _round_up(C * h_out, 8) * _round_up(w_out, 128) * itemsize
    per_img = 2 * (in_img + out_img) + tmp_img        # double-buffered blocks + value
    vmem_budget = 20 * 1024 * 1024                     # leave headroom under 32 MiB
    max_bt = max(1, vmem_budget // per_img)

    divisors = [d for d in range(1, B + 1) if B % d == 0]
    fitting = [d for d in divisors if d <= max_bt] or [1]
    # Keep at least 2 grid steps when possible so v7x's two TensorCores both
    # get work from the "parallel" batch axis.
    pref = [d for d in fitting if B // d >= 2]
    bt = max(pref) if pref else max(fitting)

    out_shape = jax.ShapeDtypeStruct((B, c_out * h_out, w_out), x_nchw.dtype)
    out_bytes = B * c_out * h_out * w_out * itemsize
    cost = pl.CostEstimate(flops=0, transcendentals=0,
                           bytes_accessed=x_packed.size * itemsize + out_bytes)

    def build(compaction):
        kernel = functools.partial(
            _shortcut_kernel, w=W, w_out=w_out, h_out=h_out, pad=pad, c=C,
            compaction=compaction)
        return pl.pallas_call(
            kernel,
            out_shape=out_shape,
            grid=(B // bt,),
            in_specs=[pl.BlockSpec((bt, C * h_out, 2 * W), lambda b: (b, 0, 0))],
            out_specs=pl.BlockSpec((bt, c_out * h_out, w_out), lambda b: (b, 0, 0)),
            compiler_params=pltpu.CompilerParams(
                dimension_semantics=("parallel",),
                vmem_limit_bytes=32 * 1024 * 1024),
            cost_estimate=cost,
        )

    # Prefer the single strided lane load; if this Mosaic build does not
    # support minor-dim strided loads, fall back to the exact-copy concat
    # variant.  (Probe happens at the first eager call; both paths are
    # bit-exact copies of the input.)
    out_flat, last_err = None, None
    for mode in ("strided", "concat"):
        try:
            out_flat = jax.block_until_ready(build(mode)(x_packed))
            break
        except Exception as e:  # lowering / compile rejection of this variant
            last_err = e
    if out_flat is None:
        raise last_err

    # FREE reshape back to NCHW.
    return out_flat.reshape(B, c_out, h_out, w_out)


if __name__ == "__main__":
    key = jax.random.PRNGKey(0)
    B, C, H, W = 2, 4, 16, 16
    planes = 2 * C  # ResNet doubles channels when it halves the spatial dims
    x = jax.random.normal(key, (B, C, H, W), dtype=jnp.float32)

    out = jax.block_until_ready(lambda_shortcut(x, planes))

    # Pure-JAX reference of the PyTorch lambda.
    ref = x[:, :, ::2, ::2]
    ref = jnp.pad(ref, ((0, 0), (planes // 4, planes // 4), (0, 0), (0, 0)))
    assert out.shape == ref.shape == (B, planes, H // 2, W // 2), (out.shape, ref.shape)
    assert jnp.allclose(out, ref), "mismatch vs reference"
    print("KERNEL_OK")
</pallas_src>

<mosaic_0001>
module attributes {stable_mosaic.version = 11 : i64} {
  func.func @_shortcut_kernel(%arg0: i32, %arg1: memref<1x32x32xf32, #tpu.memory_space<vmem>>, %arg2: memref<1x64x8xf32, #tpu.memory_space<vmem>>) attributes {dimension_semantics = [#tpu.dimension_semantics<parallel>], iteration_bounds = array<i64: 2>, scalar_prefetch = 0 : i64, scratch_operands = 0 : i64, tpu.core_type = #tpu.core_type<tc>, window_params = [{transform_indices = @transform_0, window_bounds = array<i64: 1, 32, 32>}, {transform_indices = @transform_1, window_bounds = array<i64: 1, 64, 8>}]} {
    %c0 = arith.constant 0 : index
    %c0_0 = arith.constant 0 : index
    %c0_1 = arith.constant 0 : index
    %0 = tpu.strided_load %arg1[%c0, %c0_0, %c0_1] {strides = array<i32: 1, 1, 2>} : memref<1x32x32xf32, #tpu.memory_space<vmem>>, vector<1x32x8xf32>
    %cst = arith.constant 0.000000e+00 : f32
    %1 = vector.broadcast %cst : f32 to vector<1x16x8xf32>
    %c0_2 = arith.constant 0 : index
    %c0_3 = arith.constant 0 : index
    %c0_4 = arith.constant 0 : index
    %2 = vector.load %arg2[%c0_2, %c0_3, %c0_4] : memref<1x64x8xf32, #tpu.memory_space<vmem>>, vector<1x16x8xf32>
    tpu.vector_store %arg2[%c0_2, %c0_3, %c0_4], %1 {strides = array<i32>} : memref<1x64x8xf32, #tpu.memory_space<vmem>>, vector<1x16x8xf32>,
    %c0_5 = arith.constant 0 : index
    %c48 = arith.constant 48 : index
    %c0_6 = arith.constant 0 : index
    %3 = vector.load %arg2[%c0_5, %c48, %c0_6] : memref<1x64x8xf32, #tpu.memory_space<vmem>>, vector<1x16x8xf32>
    tpu.vector_store %arg2[%c0_5, %c48, %c0_6], %1 {strides = array<i32>} : memref<1x64x8xf32, #tpu.memory_space<vmem>>, vector<1x16x8xf32>,
    %c0_7 = arith.constant 0 : index
    %c16 = arith.constant 16 : index
    %c0_8 = arith.constant 0 : index
    %4 = vector.load %arg2[%c0_7, %c16, %c0_8] : memref<1x64x8xf32, #tpu.memory_space<vmem>>, vector<1x32x8xf32>
    tpu.vector_store %arg2[%c0_7, %c16, %c0_8], %0 {strides = array<i32>} : memref<1x64x8xf32, #tpu.memory_space<vmem>>, vector<1x32x8xf32>,
    return
  }
  func.func @transform_0(%arg0: i32) -> (i32, i32, i32) {
    %c0_i32 = arith.constant 0 : i32
    %c0_i32_0 = arith.constant 0 : i32
    %c0_i32_1 = arith.constant 0 : i32
    return %arg0, %c0_i32, %c0_i32_0 : i32, i32, i32
  }
  func.func @transform_1(%arg0: i32) -> (i32, i32, i32) {
    %c0_i32 = arith.constant 0 : i32
    %c0_i32_0 = arith.constant 0 : i32
    %c0_i32_1 = arith.constant 0 : i32
    return %arg0, %c0_i32, %c0_i32_0 : i32, i32, i32
  }
}

module attributes {stable_mosaic.version = 11 : i64} {
  func.func @_shortcut_kernel(%arg0: i32, %arg1: memref<1x32x32xf32, #tpu.memory_space<vmem>>, %arg2: memref<1x64x8xf32, #tpu.memory_space<vmem>>) attributes {dimension_semantics = [#tpu.dimension_semantics<parallel>], iteration_bounds = array<i64: 2>, scalar_prefetch = 0 : i64, scratch_operands = 0 : i64, tpu.core_type = #tpu.core_type<tc>, window_params = [{transform_indices = @transform_0, window_bounds = array<i64: 1, 32, 32>}, {transform_indices = @transform_1, window_bounds = array<i64: 1, 64, 8>}]} {
    %c0 = arith.constant 0 : index
    %c0_0 = arith.constant 0 : index
    %c0_1 = arith.constant 0 : index
    %0 = vector.load %arg1[%c0, %c0_0, %c0_1] : memref<1x32x32xf32, #tpu.memory_space<vmem>>, vector<1x32x16xf32>
    %1 = vector.extract_strided_slice %0 {offsets = [0, 0, 0], sizes = [1, 32, 1], strides = [1, 1, 1]} : vector<1x32x16xf32> to vector<1x32x1xf32>
    %2 = vector.extract_strided_slice %0 {offsets = [0, 0, 2], sizes = [1, 32, 1], strides = [1, 1, 1]} : vector<1x32x16xf32> to vector<1x32x1xf32>
    %3 = vector.extract_strided_slice %0 {offsets = [0, 0, 4], sizes = [1, 32, 1], strides = [1, 1, 1]} : vector<1x32x16xf32> to vector<1x32x1xf32>
    %4 = vector.extract_strided_slice %0 {offsets = [0, 0, 6], sizes = [1, 32, 1], strides = [1, 1, 1]} : vector<1x32x16xf32> to vector<1x32x1xf32>
    %5 = vector.extract_strided_slice %0 {offsets = [0, 0, 8], sizes = [1, 32, 1], strides = [1, 1, 1]} : vector<1x32x16xf32> to vector<1x32x1xf32>
    %6 = vector.extract_strided_slice %0 {offsets = [0, 0, 10], sizes = [1, 32, 1], strides = [1, 1, 1]} : vector<1x32x16xf32> to vector<1x32x1xf32>
    %7 = vector.extract_strided_slice %0 {offsets = [0, 0, 12], sizes = [1, 32, 1], strides = [1, 1, 1]} : vector<1x32x16xf32> to vector<1x32x1xf32>
    %8 = vector.extract_strided_slice %0 {offsets = [0, 0, 14], sizes = [1, 32, 1], strides = [1, 1, 1]} : vector<1x32x16xf32> to vector<1x32x1xf32>
    %9 = tpu.concatenate %1, %2, %3, %4, %5, %6, %7, %8 in 2 : vector<1x32x1xf32>, vector<1x32x1xf32>, vector<1x32x1xf32>, vector<1x32x1xf32>, vector<1x32x1xf32>, vector<1x32x1xf32>, vector<1x32x1xf32>, vector<1x32x1xf32> -> vector<1x32x8xf32>
    %cst = arith.constant 0.000000e+00 : f32
    %10 = vector.broadcast %cst : f32 to vector<1x16x8xf32>
    %c0_2 = arith.constant 0 : index
    %c0_3 = arith.constant 0 : index
    %c0_4 = arith.constant 0 : index
    %11 = vector.load %arg2[%c0_2, %c0_3, %c0_4] : memref<1x64x8xf32, #tpu.memory_space<vmem>>, vector<1x16x8xf32>
    tpu.vector_store %arg2[%c0_2, %c0_3, %c0_4], %10 {strides = array<i32>} : memref<1x64x8xf32, #tpu.memory_space<vmem>>, vector<1x16x8xf32>,
    %c0_5 = arith.constant 0 : index
    %c48 = arith.constant 48 : index
    %c0_6 = arith.constant 0 : index
    %12 = vector.load %arg2[%c0_5, %c48, %c0_6] : memref<1x64x8xf32, #tpu.memory_space<vmem>>, vector<1x16x8xf32>
    tpu.vector_store %arg2[%c0_5, %c48, %c0_6], %10 {strides = array<i32>} : memref<1x64x8xf32, #tpu.memory_space<vmem>>, vector<1x16x8xf32>,
    %c0_7 = arith.constant 0 : index
    %c16 = arith.constant 16 : index
    %c0_8 = arith.constant 0 : index
    %13 = vector.load %arg2[%c0_7, %c16, %c0_8] : memref<1x64x8xf32, #tpu.memory_space<vmem>>, vector<1x32x8xf32>
    tpu.vector_store %arg2[%c0_7, %c16, %c0_8], %9 {strides = array<i32>} : memref<1x64x8xf32, #tpu.memory_space<vmem>>, vector<1x32x8xf32>,
    return
  }
  func.func @transform_0(%arg0: i32) -> (i32, i32, i32) {
    %c0_i32 = arith.constant 0 : i32
    %c0_i32_0 = arith.constant 0 : i32
    %c0_i32_1 = arith.constant 0 : i32
    return %arg0, %c0_i32, %c0_i32_0 : i32, i32, i32
  }
  func.func @transform_1(%arg0: i32) -> (i32, i32, i32) {
    %c0_i32 = arith.constant 0 : i32
    %c0_i32_0 = arith.constant 0 : i32
    %c0_i32_1 = arith.constant 0 : i32
    return %arg0, %c0_i32, %c0_i32_0 : i32, i32, i32
  }
}

</mosaic_0001>

<llo_original>
// kernel: tpu_custom_call.1
$region0: #{tpu_custom_call.1}
  #allocation0 [shape = 'u32[]', space=smem, size = 0x4, offset = 0x4, fixed_abs, tag = 'smem constant byte address 0x4 - core index']
  #allocation1 [shape = 'u32[144,128]{1,0:T(1,128)}', space=vmem, size = 0x12000, scoped, tag = 'internal scratch']
  %s0 = inlined_call_operand.hbm [shape: f32[2,32,32], index: 0, kind: input, shape index: {}]
  %s1 = inlined_call_operand.vmem [shape: f32[2,64,8], index: 1, kind: output, shape index: {}]
  %s2 = sld [smem:[#allocation0]]
  $region41: #{tpu_custom_call.1} parent=0
    _
  %s4 = ssub.s32 1, %s2
  %s5 = scalar_select 0, %s4, %s2
  $region1: #{tpu_custom_call.1} parent=0
    #allocation2 [shape = 'u8[32768]{0}', space=vmem, size = 0x8000, scoped, tag = 'input window, operand 0']
    #allocation3 [shape = 's32[2]{0}', space=sflag, size = 0x8, scoped, tag = 'scoped memory for tpu_custom_call.1']
    %6 = vsyncpa [#allocation3], 0
    %s7 = scalar_lea.sflag [#allocation3], 1
    %8 = vsyncpa %s7, 0
    loop: start=0, step=1, limit=4
    $region2: #{tpu_custom_call.1} parent=1 // loop_pre_header
      _
    $region3: #{tpu_custom_call.1} parent=1 // loop_header
      %s10 = sphi 0, %s14
      %p11 = scmp.ge.s32.totalorder %s10, 4
      %s20 = sphi 0, %s22
      %s23 = sphi 0, %s20
      %s24 = sphi 0, %s23
      %s40 = sphi 0, %s24
      %s46 = sphi 0, %s48
      %s49 = sphi 0, %s46
      %s50 = sphi 0, %s49
      %s66 = sphi 0, %s50
    $region4: #{tpu_custom_call.1} parent=1 // loop_header_branch
      %13 = sbr.rel (%p11) target = $region8
    $region5: #{tpu_custom_call.1} parent=1 // loop_body
      %s15 = ssub.s32 %s10, 1
      %s16 = ssub.s32 %s10, 2
      %s17 = sadd.s32 %s10, 1
      %s18 = ssub.s32 %s10, %s17
      %p19 = scmp.eq.s32.totalorder %s18, 0
      %s21 = sadd.s32 %s20, 1
      %s22 = scalar_select %p19, %s20, %s21
      %p25 = pneg %p19
      %p26 = scmp.eq.s32.totalorder %s10, 1
      %p27 = por %p25, %p26
      %p28 = scmp.ne.s32.totalorder %s20, %s23
      %p29 = scmp.eq.s32.totalorder %s10, 0
      %p30 = por %p28, %p29
      %p31 = scmp.ne.s32.totalorder %s20, %s23
      %p32 = scmp.eq.s32.totalorder %s15, 1
      %p33 = por %p31, %p32
      %p34 = scmp.ne.s32.totalorder %s23, %s24
      %p35 = scmp.eq.s32.totalorder %s15, 0
      %p36 = por %p34, %p35
      %p37 = scmp.ne.s32.totalorder %s23, %s24
      %p38 = scmp.eq.s32.totalorder %s16, 1
      %p39 = por %p37, %p38
      %p41 = scmp.ne.s32.totalorder %s24, %s40
      %p42 = scmp.eq.s32.totalorder %s16, 0
      %p43 = por %p41, %p42
      %s44 = ssub.s32 %s10, %s17
      %p45 = scmp.eq.s32.totalorder %s44, 0
      %s47 = sadd.s32 %s46, 1
      %s48 = scalar_select %p45, %s46, %s47
      %p51 = pneg %p45
      %p52 = scmp.eq.s32.totalorder %s10, 1
      %p53 = por %p51, %p52
      %p54 = scmp.ne.s32.totalorder %s46, %s49
      %p55 = scmp.eq.s32.totalorder %s10, 0
      %p56 = por %p54, %p55
      %p57 = scmp.ne.s32.totalorder %s46, %s49
      %p58 = scmp.eq.s32.totalorder %s15, 1
      %p59 = por %p57, %p58
      %p60 = scmp.ne.s32.totalorder %s49, %s50
      %p61 = scmp.eq.s32.totalorder %s15, 0
      %p62 = por %p60, %p61
      %p63 = scmp.ne.s32.totalorder %s49, %s50
      %p64 = scmp.eq.s32.totalorder %s16, 1
      %p65 = por %p63, %p64
      %p67 = scmp.ne.s32.totalorder %s50, %s66
      %p68 = scmp.eq.s32.totalorder %s16, 0
      %p69 = por %p67, %p68
      %p70 = scmp.le.s32.totalorder 1, %s10
      %p71 = scmp.lt.s32.totalorder %s10, 3
      %p72 = pnand %p70, %p71
      %p73 = pneg %p72
      // Predicated region
      $region9: #{tpu_custom_call.1} parent=5 // pred_check
        _
      $region10: #{tpu_custom_call.1} parent=5 // pred_check_branch
        %75 = sbr.rel (%p72) target = $region12
      $region11: #{tpu_custom_call.1} parent=5 // pred_region
        %s76 = ssub.s32 %s10, 1
      $region12: #{tpu_custom_call.1} parent=5 // pred_fallthru
        _
      %p77 = scmp.lt.s32.totalorder %s10, 2
      // Predicated region
      $region13: #{tpu_custom_call.1} parent=5 // pred_check
        %p78 = pneg %p77
      $region14: #{tpu_custom_call.1} parent=5 // pred_check_branch
        %80 = sbr.rel (%p78) target = $region16
      $region15: #{tpu_custom_call.1} parent=5 // pred_region
        // Predicated region
        $region17: #{tpu_custom_call.1} parent=15 // pred_check
          %p81 = pneg %p30
        $region18: #{tpu_custom_call.1} parent=15 // pred_check_branch
          %83 = sbr.rel (%p81) target = $region20
        $region19: #{tpu_custom_call.1} parent=15 // pred_region
          %s84 = sand.u32 %s20, 1
          %s85 = scalar_lea.sflag [#allocation3], %s84
          %s86 = sand.u32 %s20, 1
          %s87 = smul.addr %s86, 32
          %s88 = scalar_lea.vmem [#allocation2], %s87
          %s90 = ssub.s32 512, 512
          %91 = vsyncadd %s85, %s90
          %s92 = smul.addr %s10, 4
          %s93 = smul.addr %s92, 128
          %s94 = scalar_lea.hbm %s0, %s93
          %s95 = sshll.u32 %s88, 4
          %s96 = int_to_ptr.vmem [resolvable:$true] %s95
          %101 = dma.hbm_to_vmem [thread:$0]  %s94, 512, %s96, %s85, 128, 128, 8
        $region20: #{tpu_custom_call.1} parent=15 // pred_fallthru
          _
      $region16: #{tpu_custom_call.1} parent=5 // pred_fallthru
        _
      %p102 = scmp.le.s32.totalorder 1, %s10
      %p103 = scmp.lt.s32.totalorder %s10, 3
      %p104 = pnand %p102, %p103
      %p105 = pneg %p104
      // Predicated region
      $region21: #{tpu_custom_call.1} parent=5 // pred_check
        _
      $region22: #{tpu_custom_call.1} parent=5 // pred_check_branch
        %107 = sbr.rel (%p104) target = $region24
      $region23: #{tpu_custom_call.1} parent=5 // pred_region
        %s108 = ssub.s32 %s10, 1
        %s109 = sand.u32 %s23, 1
        %s110 = scalar_lea.sflag [#allocation3], %s109
        %s111 = sand.u32 %s23, 1
        %s112 = smul.addr %s111, 32
        %s113 = scalar_lea.vmem [#allocation2], %s112
        // Predicated region
        $region25: #{tpu_custom_call.1} parent=23 // pred_check
          %p114 = pneg %p36
        $region26: #{tpu_custom_call.1} parent=23 // pred_check_branch
          %116 = sbr.rel (%p114) target = $region28
        $region27: #{tpu_custom_call.1} parent=23 // pred_region
          %117 = dma.done %s110, 512
        $region28: #{tpu_custom_call.1} parent=23 // pred_fallthru
          _
        %s118 = sand.u32 %s23, 1
        %s119 = scalar_lea.sflag [#allocation3], %s118
        %s120 = sand.u32 %s23, 1
        %s121 = smul.addr %s120, 32
        %s122 = scalar_lea.vmem [#allocation2], %s121
        %p123 = pneg %p36
        %p124 = pneg %p33
        %p125 = pneg %p62
        %p126 = pneg %p59
        %p127 = scmp.lt.s32.totalorder %s15, 1
        %s128 = scalar_select %p127, %s15, 1
        %s129 = smul.addr %s128, 8
        %s130 = smul.addr %s129, 8
        %s131 = scalar_lea.vmem %s1, %s130
        %p132 = scmp.lt.s32.totalorder %s15, 1
        %s133 = scalar_select %p132, %s15, 1
        %s134 = smul.addr %s133, 8
        %s135 = smul.addr %s134, 8
        %s136 = scalar_lea.vmem %s1, %s135
        %v137 = vld [vmem:[%s113] sm:$0xff]
        %v138 = vld [vmem:[%s113 + $0x8] sm:$0xff]
        %v139 = vld [vmem:[%s113 + $0x10] sm:$0xff]
        %v140 = vld [vmem:[%s113 + $0x18] sm:$0xff]
        %145 = vrot.lane.b32.xlu0 %v137, 127
        %v146 = vpop.permute.xlu0 %145
        %147 = vrot.lane.b32.xlu0 %v138, 127
        %v148 = vpop.permute.xlu0 %147
        %149 = vrot.lane.b32.xlu0 %v139, 127
        %v150 = vpop.permute.xlu0 %149
        %151 = vrot.lane.b32.xlu0 %v140, 127
        %v152 = vpop.permute.xlu0 %151
        %157 = vrot.lane.b32.xlu0 %v137, 126
        %v158 = vpop.permute.xlu0 %157
        %159 = vrot.lane.b32.xlu0 %v138, 126
        %v160 = vpop.permute.xlu0 %159
        %161 = vrot.lane.b32.xlu0 %v139, 126
        %v162 = vpop.permute.xlu0 %161
        %163 = vrot.lane.b32.xlu0 %v140, 126
        %v164 = vpop.permute.xlu0 %163
        %169 = vrot.lane.b32.xlu0 %v137, 125
        %v170 = vpop.permute.xlu0 %169
        %171 = vrot.lane.b32.xlu0 %v138, 125
        %v172 = vpop.permute.xlu0 %171
        %173 = vrot.lane.b32.xlu0 %v139, 125
        %v174 = vpop.permute.xlu0 %173
        %175 = vrot.lane.b32.xlu0 %v140, 125
        %v176 = vpop.permute.xlu0 %175
        %181 = vrot.lane.b32.xlu0 %v137, 124
        %v182 = vpop.permute.xlu0 %181
        %183 = vrot.lane.b32.xlu0 %v138, 124
        %v184 = vpop.permute.xlu0 %183
        %185 = vrot.lane.b32.xlu0 %v139, 124
        %v186 = vpop.permute.xlu0 %185
        %187 = vrot.lane.b32.xlu0 %v140, 124
        %v188 = vpop.permute.xlu0 %187
        %193 = vrot.lane.b32.xlu0 %v137, 123
        %v194 = vpop.permute.xlu0 %193
        %195 = vrot.lane.b32.xlu0 %v138, 123
        %v196 = vpop.permute.xlu0 %195
        %197 = vrot.lane.b32.xlu0 %v139, 123
        %v198 = vpop.permute.xlu0 %197
        %199 = vrot.lane.b32.xlu0 %v140, 123
        %v200 = vpop.permute.xlu0 %199
        %205 = vrot.lane.b32.xlu0 %v137, 122
        %v206 = vpop.permute.xlu0 %205
        %207 = vrot.lane.b32.xlu0 %v138, 122
        %v208 = vpop.permute.xlu0 %207
        %209 = vrot.lane.b32.xlu0 %v139, 122
        %v210 = vpop.permute.xlu0 %209
        %211 = vrot.lane.b32.xlu0 %v140, 122
        %v212 = vpop.permute.xlu0 %211
        %217 = vrot.lane.b32.xlu0 %v137, 121
        %v218 = vpop.permute.xlu0 %217
        %219 = vrot.lane.b32.xlu0 %v138, 121
        %v220 = vpop.permute.xlu0 %219
        %221 = vrot.lane.b32.xlu0 %v139, 121
        %v222 = vpop.permute.xlu0 %221
        %223 = vrot.lane.b32.xlu0 %v140, 121
        %v224 = vpop.permute.xlu0 %223
        %vm229 = vcmask 7168
        %v230 = vsel %vm229, %v137, %v146
        %v231 = vsel %vm229, %v138, %v148
        %v232 = vsel %vm229, %v139, %v150
        %v233 = vsel %vm229, %v140, %v152
        %vm234 = vcmask 15360
        %v235 = vsel %vm234, %v230, %v158
        %v236 = vsel %vm234, %v231, %v160
        %v237 = vsel %vm234, %v232, %v162
        %v238 = vsel %vm234, %v233, %v164
        %vm239 = vcmask 23552
        %v240 = vsel %vm239, %v235, %v170
        %v241 = vsel %vm239, %v236, %v172
        %v242 = vsel %vm239, %v237, %v174
        %v243 = vsel %vm239, %v238, %v176
        %vm244 = vcmask 31744
        %v245 = vsel %vm244, %v240, %v182
        %v246 = vsel %vm244, %v241, %v184
        %v247 = vsel %vm244, %v242, %v186
        %v248 = vsel %vm244, %v243, %v188
        %vm249 = vcmask 39936
        %v250 = vsel %vm249, %v245, %v194
        %v251 = vsel %vm249, %v246, %v196
        %v252 = vsel %vm249, %v247, %v198
        %v253 = vsel %vm249, %v248, %v200
        %vm254 = vcmask 48128
        %v255 = vsel %vm254, %v250, %v206
        %v256 = vsel %vm254, %v251, %v208
        %v257 = vsel %vm254, %v252, %v210
        %v258 = vsel %vm254, %v253, %v212
        %vm259 = vcmask 56320
        %v260 = vsel %vm259, %v255, %v218
        %v261 = vsel %vm259, %v256, %v220
        %v262 = vsel %vm259, %v257, %v222
        %v263 = vsel %vm259, %v258, %v224
        %vm264 = vcmask 64512
        %265 = vst.msk [vmem:[%s136] sm:$0xff] %vm264, 0.0
        %266 = vst.msk [vmem:[%s136 + $0x8] sm:$0xff] %vm264, 0.0
        %267 = vst.msk [vmem:[%s136 + $0x30] sm:$0xff] %vm264, 0.0
        %268 = vst.msk [vmem:[%s136 + $0x38] sm:$0xff] %vm264, 0.0
        %269 = vst.msk [vmem:[%s136 + $0x10] sm:$0xff] %vm264, %v260
        %270 = vst.msk [vmem:[%s136 + $0x18] sm:$0xff] %vm264, %v261
        %271 = vst.msk [vmem:[%s136 + $0x20] sm:$0xff] %vm264, %v262
        %272 = vst.msk [vmem:[%s136 + $0x28] sm:$0xff] %vm264, %v263
        %p273 = scmp.lt.s32.totalorder %s15, 1
        %s274 = scalar_select %p273, %s15, 1
        %s275 = smul.addr %s274, 8
        %s276 = smul.addr %s275, 8
        %s277 = scalar_lea.vmem %s1, %s276
        // Predicated region
        $region29: #{tpu_custom_call.1} parent=23 // pred_check
          %p278 = pneg %p59
        $region30: #{tpu_custom_call.1} parent=23 // pred_check_branch
          %280 = sbr.rel (%p278) target = $region32
        $region31: #{tpu_custom_call.1} parent=23 // pred_region
          _
        $region32: #{tpu_custom_call.1} parent=23 // pred_fallthru
          _
      $region24: #{tpu_custom_call.1} parent=5 // pred_fallthru
        _
      %p281 = scmp.le.s32.totalorder 2, %s10
      // Predicated region
      $region33: #{tpu_custom_call.1} parent=5 // pred_check
        %p282 = pneg %p281
      $region34: #{tpu_custom_call.1} parent=5 // pred_check_branch
        %284 = sbr.rel (%p282) target = $region36
      $region35: #{tpu_custom_call.1} parent=5 // pred_region
        %s285 = ssub.s32 %s10, 2
        // Predicated region
        $region37: #{tpu_custom_call.1} parent=35 // pred_check
          %p286 = pneg %p65
        $region38: #{tpu_custom_call.1} parent=35 // pred_check_branch
          %288 = sbr.rel (%p286) target = $region40
        $region39: #{tpu_custom_call.1} parent=35 // pred_region
          %p289 = scmp.lt.s32.totalorder %s16, 1
          %s290 = scalar_select %p289, %s16, 1
          %s291 = smul.addr %s290, 8
          %s292 = smul.addr %s291, 8
          %s293 = scalar_lea.vmem %s1, %s292
        $region40: #{tpu_custom_call.1} parent=35 // pred_fallthru
          _
      $region36: #{tpu_custom_call.1} parent=5 // pred_fallthru
        _
    $region6: #{tpu_custom_call.1} parent=1 // loop_footer
      %s14 = sadd.s32 1, %s10
    $region7: #{tpu_custom_call.1} parent=1 // loop_footer_branch
      %9 = sbr.rel target = $region3
    $region8: #{tpu_custom_call.1} parent=1 // loop_exit
      _
    %294 = vsyncpa [#allocation3], 1
    %s295 = scalar_lea.sflag [#allocation3], 1
    %296 = vsyncpa %s295, 1

</llo_original>
